<compile_context>
chip_gen: v7x
topology: tpu7x:2x2x1
jax: 0.10.0
libtpu: 0.0.40
codegen_flags: <defaults>
</compile_context>

<pallas_src>
import numpy as np
import jax
import jax.numpy as jnp
from jax.experimental import pallas as pl
from jax.experimental.pallas import tpu as pltpu

# ---- static problem sizes (small, consistent with the module) ----
B = 2            # batch
CIN = 1          # encoder input channels
L = 16           # input_size (signal length)
K = 3            # conv kernel size
PAD = 1          # conv padding ('same' length)
C1 = 8           # encoder hidden channels, layer 1
C2 = 8           # encoder hidden channels, layer 2
OUTPUT_DIM = C2 * L   # 128 == dummy_output.numel() // dummy_output.shape[0]
HIDDEN = 128     # fc hidden
OUT = 4          # output_size
OUT_PAD = 128    # lane-padded output width (dense, unmasked stores)

MAX_BT = 512     # batch-tile cap (review: sweepable; 512 amortizes step cost)


def _cnn_head_kernel(x_ref, w1_ref, b1_ref, w2_ref, b2_ref,
                     wfc1_ref, bfc1_ref, wfc2_ref, bfc2_ref, out_ref):
    """conv1+ReLU -> conv2+ReLU -> (flatten) -> fc1+ReLU -> fc2.

    All activations are lane-dense (BT, 128) slabs; all four layers are MXU
    matmuls with bf16 operands and f32 accumulation.  Elementwise stays f32.
    """
    x = x_ref[...].astype(jnp.bfloat16)                       # (BT, L)

    # Conv1d #1 (pad=1) as a banded matmul: (BT, L) @ (L, C1*L).
    h1 = jnp.dot(x, w1_ref[...], preferred_element_type=jnp.float32)
    h1 = jnp.maximum(h1 + b1_ref[...], 0.0)                   # (BT, C1*L) f32

    # Conv1d #2 (pad=1) as a banded matmul over (channel, position):
    # (BT, C1*L) @ (C1*L, C2*L).  Output lane index = c2*L + l, i.e. exactly
    # the nn.Flatten() order -> no reshape needed before FC1.
    h2 = jnp.dot(h1.astype(jnp.bfloat16), w2_ref[...],
                 preferred_element_type=jnp.float32)
    h2 = jnp.maximum(h2 + b2_ref[...], 0.0)                   # (BT, C2*L) f32

    # Linear(OUTPUT_DIM, 128) + ReLU: one (BT,128) @ (128,128) dot.
    z1 = jnp.dot(h2.astype(jnp.bfloat16), wfc1_ref[...],
                 preferred_element_type=jnp.float32)
    z1 = jnp.maximum(z1 + bfc1_ref[...], 0.0)                 # (BT, HIDDEN) f32

    # Linear(128, OUT) with lanes zero-padded to 128 -> dense unmasked store.
    out = jnp.dot(z1.astype(jnp.bfloat16), wfc2_ref[...],
                  preferred_element_type=jnp.float32) + bfc2_ref[...]
    out_ref[...] = out.astype(out_ref.dtype)                  # (BT, OUT_PAD)


def _conv1d_to_band(w, length, pad):
    """(Cout, Cin, K) conv weight -> dense banded matrix (Cin*L, Cout*L).

    M[ci*L + li, co*L + lo] = w[co, ci, li - lo + pad]  (zero outside the band)
    so that a 'same'-padded stride-1 Conv1d becomes  flat(x) @ M  with
    channel-major flattening on both sides (matching nn.Flatten order).
    """
    w = np.asarray(w, dtype=np.float32)
    cout, cin, k = w.shape
    li = np.arange(length)[:, None]          # input position
    lo = np.arange(length)[None, :]          # output position
    kk = li - lo + pad                       # kernel tap index
    valid = (kk >= 0) & (kk < k)
    band = w[:, :, np.clip(kk, 0, k - 1)] * valid[None, None]   # (Cout,Cin,Li,Lo)
    band = np.transpose(band, (1, 2, 0, 3))                     # (Cin,Li,Cout,Lo)
    return band.reshape(cin * length, cout * length)


def pack_params(params):
    """One-time host-side repacking of the frozen weights.

    Conv weights -> banded bf16 matrices (each conv = one MXU matmul);
    FC weights transposed + bf16 (fc2 zero-padded to 128 output lanes);
    biases f32, pre-broadcast to (1, lanes).
    """
    w1, b1, w2, b2, wfc1, bfc1, wfc2, bfc2 = params
    w1_band = jnp.asarray(_conv1d_to_band(w1, L, PAD), jnp.bfloat16)  # (L, C1*L)
    w2_band = jnp.asarray(_conv1d_to_band(w2, L, PAD), jnp.bfloat16)  # (C1*L, C2*L)
    b1_b = jnp.repeat(jnp.asarray(b1, jnp.float32), L)[None, :]       # (1, C1*L)
    b2_b = jnp.repeat(jnp.asarray(b2, jnp.float32), L)[None, :]       # (1, C2*L)
    wfc1_t = jnp.asarray(wfc1, jnp.float32).T.astype(jnp.bfloat16)    # (OUTPUT_DIM, HIDDEN)
    bfc1_b = jnp.asarray(bfc1, jnp.float32)[None, :]                  # (1, HIDDEN)
    # fc2: zero-pad output lanes 4 -> 128 for dense (unmasked) stores.
    wfc2_t = np.zeros((HIDDEN, OUT_PAD), np.float32)
    wfc2_t[:, :OUT] = np.asarray(wfc2, np.float32).T
    wfc2_t = jnp.asarray(wfc2_t, jnp.bfloat16)                        # (HIDDEN, OUT_PAD)
    bfc2_b = np.zeros((1, OUT_PAD), np.float32)
    bfc2_b[0, :OUT] = np.asarray(bfc2, np.float32)
    bfc2_b = jnp.asarray(bfc2_b, jnp.float32)                         # (1, OUT_PAD)
    return (w1_band, b1_b, w2_band, b2_b, wfc1_t, bfc1_b, wfc2_t, bfc2_b)


def _batch_tiling(b):
    """Pick (padded_batch, batch_tile).

    * bt is a multiple of 8 (sublane), capped at MAX_BT.
    * Whenever there are >= 16 rows we force >= 2 grid steps so the
      "parallel" batch axis can shard across both TensorCores on v7x.
    * The batch is zero-padded up to a whole number of tiles (ragged-safe).
    VMEM is never the binding resource here (<~3 MB footprint at bt=512).
    """
    bp = max(8, -(-b // 8) * 8)                   # round up to multiple of 8
    if bp < 16:
        return bp, bp                             # grid=(1,) — tiny batch
    bt = min(MAX_BT, -(-(bp // 2) // 8) * 8)      # >= 2 tiles, multiple of 8
    bp = -(-bp // bt) * bt                        # pad to whole tiles
    return bp, bt


@jax.jit
def cnn1d_frozen_conv_forward(x, packed):
    """x: (B, CIN=1, L) float32, NCW layout (same as PyTorch Conv1d input)."""
    w1_band, b1_b, w2_band, b2_b, wfc1_t, bfc1_b, wfc2_t, bfc2_b = packed
    b = x.shape[0]
    x2d = x.reshape(b, L)                          # CIN == 1
    bp, bt = _batch_tiling(b)
    if bp != b:
        x2d = jnp.pad(x2d, ((0, bp - b), (0, 0)))  # zero rows, sliced off below
    grid = (bp // bt,)

    # Grid-invariant weights: constant index_map + single buffering
    # (pl.Buffered(1)) -> VMEM-resident, no per-step copy bookkeeping.
    full = lambda i: (0, 0)
    def const_spec(shape):
        return pl.BlockSpec(shape, full, pipeline_mode=pl.Buffered(1))

    flops = 2 * bp * (L * C1 * L + (C1 * L) * (C2 * L)
                      + OUTPUT_DIM * HIDDEN + HIDDEN * OUT_PAD)
    bytes_accessed = (bp * L * 4 + bp * OUT_PAD * 4            # x in, out
                      + (L * C1 * L + C1 * L * C2 * L
                         + OUTPUT_DIM * HIDDEN + HIDDEN * OUT_PAD) * 2  # bf16 W
                      + (C1 * L + C2 * L + HIDDEN + OUT_PAD) * 4)       # f32 b

    out = pl.pallas_call(
        _cnn_head_kernel,
        out_shape=jax.ShapeDtypeStruct((bp, OUT_PAD), jnp.float32),
        grid=grid,
        in_specs=[
            pl.BlockSpec((bt, L), lambda i: (i, 0)),           # x tile
            const_spec((L, C1 * L)),                           # conv1 band (bf16)
            const_spec((1, C1 * L)),                           # conv1 bias (f32)
            const_spec((C1 * L, C2 * L)),                      # conv2 band (bf16)
            const_spec((1, C2 * L)),                           # conv2 bias (f32)
            const_spec((OUTPUT_DIM, HIDDEN)),                  # fc1 W^T (bf16)
            const_spec((1, HIDDEN)),                           # fc1 bias (f32)
            const_spec((HIDDEN, OUT_PAD)),                     # fc2 W^T padded (bf16)
            const_spec((1, OUT_PAD)),                          # fc2 bias padded (f32)
        ],
        out_specs=pl.BlockSpec((bt, OUT_PAD), lambda i: (i, 0)),
        compiler_params=pltpu.CompilerParams(
            dimension_semantics=("parallel",)),
        cost_estimate=pl.CostEstimate(flops=flops, transcendentals=0,
                                      bytes_accessed=bytes_accessed),
    )(x2d, w1_band, b1_b, w2_band, b2_b, wfc1_t, bfc1_b, wfc2_t, bfc2_b)

    return out[:b, :OUT]


def _init_params(key):
    ks = jax.random.split(key, 8)
    scale = 0.1
    w1 = scale * jax.random.normal(ks[0], (C1, CIN, K), jnp.float32)
    b1 = scale * jax.random.normal(ks[1], (C1,), jnp.float32)
    w2 = scale * jax.random.normal(ks[2], (C2, C1, K), jnp.float32)
    b2 = scale * jax.random.normal(ks[3], (C2,), jnp.float32)
    wfc1 = scale * jax.random.normal(ks[4], (HIDDEN, OUTPUT_DIM), jnp.float32)
    bfc1 = scale * jax.random.normal(ks[5], (HIDDEN,), jnp.float32)
    wfc2 = scale * jax.random.normal(ks[6], (OUT, HIDDEN), jnp.float32)
    bfc2 = scale * jax.random.normal(ks[7], (OUT,), jnp.float32)
    return (w1, b1, w2, b2, wfc1, bfc1, wfc2, bfc2)


def _reference_forward(x, params):
    """Pure-JAX f32 reference with PyTorch semantics:
    Conv1d(pad=1)+ReLU x2 -> Flatten -> Linear+ReLU -> Linear."""
    w1, b1, w2, b2, wfc1, bfc1, wfc2, bfc2 = params
    b = x.shape[0]
    xpad = jnp.pad(x, ((0, 0), (0, 0), (PAD, PAD)))
    h1 = jnp.zeros((b, C1, L), jnp.float32)
    for k in range(K):
        for c in range(CIN):
            h1 = h1 + w1[:, c, k][None, :, None] * xpad[:, c, k:k + L][:, None, :]
    h1 = jax.nn.relu(h1 + b1[None, :, None])
    h1p = jnp.pad(h1, ((0, 0), (0, 0), (PAD, PAD)))
    h2 = jnp.zeros((b, C2, L), jnp.float32)
    for k in range(K):
        for c in range(C1):
            h2 = h2 + w2[:, c, k][None, :, None] * h1p[:, c, k:k + L][:, None, :]
    h2 = jax.nn.relu(h2 + b2[None, :, None])
    flat = h2.reshape(b, OUTPUT_DIM)          # nn.Flatten()
    z1 = jax.nn.relu(flat @ wfc1.T + bfc1)
    return z1 @ wfc2.T + bfc2


if __name__ == "__main__":
    key = jax.random.PRNGKey(0)
    k_x, k_p = jax.random.split(key)
    x = jax.random.normal(k_x, (B, CIN, L), jnp.float32)
    params = _init_params(k_p)

    packed = pack_params(params)
    out = jax.block_until_ready(cnn1d_frozen_conv_forward(x, packed))

    # The kernel stores all matmul weights in bf16; quantize the reference's
    # weight matrices identically so the comparison only sees the in-kernel
    # activation casts / accumulation-order differences.
    def _q(w):
        return jnp.asarray(w, jnp.float32).astype(jnp.bfloat16).astype(jnp.float32)
    params_q = tuple(_q(p) if p.ndim >= 2 else jnp.asarray(p, jnp.float32)
                     for p in params)
    ref = _reference_forward(x, params_q)

    assert out.shape == (B, OUT), out.shape
    assert jnp.allclose(out, ref, atol=2e-2, rtol=2e-2), (out, ref)

    # TODO(synk): parameter freezing (requires_grad=False) and the dummy-input
    # probe that derives output_dim are host/training-time logic with no kernel
    # analogue; at B=2 the call is launch/weight-DMA bound — the real lever is
    # amortizing it (batch requests together / keep weights resident across
    # calls), which is call-site policy rather than kernel code.
    print("KERNEL_OK")
</pallas_src>

<mosaic_0001>
module attributes {stable_mosaic.version = 11 : i64} {
  func.func @_cnn_head_kernel(%arg0: i32, %arg1: memref<8x16xf32, #tpu.memory_space<vmem>>, %arg2: memref<16x128xbf16, #tpu.memory_space<vmem>>, %arg3: memref<1x128xf32, #tpu.memory_space<vmem>>, %arg4: memref<128x128xbf16, #tpu.memory_space<vmem>>, %arg5: memref<1x128xf32, #tpu.memory_space<vmem>>, %arg6: memref<128x128xbf16, #tpu.memory_space<vmem>>, %arg7: memref<1x128xf32, #tpu.memory_space<vmem>>, %arg8: memref<128x128xbf16, #tpu.memory_space<vmem>>, %arg9: memref<1x128xf32, #tpu.memory_space<vmem>>, %arg10: memref<8x128xf32, #tpu.memory_space<vmem>>) attributes {dimension_semantics = [#tpu.dimension_semantics<parallel>], iteration_bounds = array<i64: 1>, scalar_prefetch = 0 : i64, scratch_operands = 0 : i64, tpu.core_type = #tpu.core_type<tc>, window_params = [{transform_indices = @transform_0, window_bounds = array<i64: 8, 16>}, {pipeline_mode = #tpu.pipeline_mode<synchronous>, transform_indices = @transform_1, window_bounds = array<i64: 16, 128>}, {pipeline_mode = #tpu.pipeline_mode<synchronous>, transform_indices = @transform_2, window_bounds = array<i64: 1, 128>}, {pipeline_mode = #tpu.pipeline_mode<synchronous>, transform_indices = @transform_3, window_bounds = array<i64: 128, 128>}, {pipeline_mode = #tpu.pipeline_mode<synchronous>, transform_indices = @transform_4, window_bounds = array<i64: 1, 128>}, {pipeline_mode = #tpu.pipeline_mode<synchronous>, transform_indices = @transform_5, window_bounds = array<i64: 128, 128>}, {pipeline_mode = #tpu.pipeline_mode<synchronous>, transform_indices = @transform_6, window_bounds = array<i64: 1, 128>}, {pipeline_mode = #tpu.pipeline_mode<synchronous>, transform_indices = @transform_7, window_bounds = array<i64: 128, 128>}, {pipeline_mode = #tpu.pipeline_mode<synchronous>, transform_indices = @transform_8, window_bounds = array<i64: 1, 128>}, {transform_indices = @transform_9, window_bounds = array<i64: 8, 128>}]} {
    %c0 = arith.constant 0 : index
    %c0_0 = arith.constant 0 : index
    %0 = vector.load %arg1[%c0, %c0_0] : memref<8x16xf32, #tpu.memory_space<vmem>>, vector<8x16xf32>
    %1 = arith.truncf %0 : vector<8x16xf32> to vector<8x16xbf16>
    %c0_1 = arith.constant 0 : index
    %c0_2 = arith.constant 0 : index
    %2 = vector.load %arg2[%c0_1, %c0_2] : memref<16x128xbf16, #tpu.memory_space<vmem>>, vector<16x128xbf16>
    %cst = arith.constant dense<0.000000e+00> : vector<8x128xf32>
    %3 = tpu.matmul %1, %2, %cst {dimension_numbers = #tpu.dot_dimension_numbers<[1], [0], [0], [1], [0, 0, 1, 1], [], []>} : vector<8x16xbf16>, vector<16x128xbf16>, vector<8x128xf32> -> vector<8x128xf32>
    %c0_3 = arith.constant 0 : index
    %c0_4 = arith.constant 0 : index
    %4 = vector.load %arg3[%c0_3, %c0_4] : memref<1x128xf32, #tpu.memory_space<vmem>>, vector<1x128xf32>
    %5 = vector.broadcast %4 : vector<1x128xf32> to vector<8x128xf32>
    %6 = arith.addf %3, %5 : vector<8x128xf32>
    %cst_5 = arith.constant 0.000000e+00 : f32
    %7 = vector.broadcast %cst_5 : f32 to vector<8x128xf32>
    %8 = arith.maximumf %6, %7 : vector<8x128xf32>
    %9 = arith.truncf %8 : vector<8x128xf32> to vector<8x128xbf16>
    %c0_6 = arith.constant 0 : index
    %c0_7 = arith.constant 0 : index
    %10 = vector.load %arg4[%c0_6, %c0_7] : memref<128x128xbf16, #tpu.memory_space<vmem>>, vector<128x128xbf16>
    %cst_8 = arith.constant dense<0.000000e+00> : vector<8x128xf32>
    %11 = tpu.matmul %9, %10, %cst_8 {dimension_numbers = #tpu.dot_dimension_numbers<[1], [0], [0], [1], [0, 0, 1, 1], [], []>} : vector<8x128xbf16>, vector<128x128xbf16>, vector<8x128xf32> -> vector<8x128xf32>
    %c0_9 = arith.constant 0 : index
    %c0_10 = arith.constant 0 : index
    %12 = vector.load %arg5[%c0_9, %c0_10] : memref<1x128xf32, #tpu.memory_space<vmem>>, vector<1x128xf32>
    %13 = vector.broadcast %12 : vector<1x128xf32> to vector<8x128xf32>
    %14 = arith.addf %11, %13 : vector<8x128xf32>
    %cst_11 = arith.constant 0.000000e+00 : f32
    %15 = vector.broadcast %cst_11 : f32 to vector<8x128xf32>
    %16 = arith.maximumf %14, %15 : vector<8x128xf32>
    %17 = arith.truncf %16 : vector<8x128xf32> to vector<8x128xbf16>
    %c0_12 = arith.constant 0 : index
    %c0_13 = arith.constant 0 : index
    %18 = vector.load %arg6[%c0_12, %c0_13] : memref<128x128xbf16, #tpu.memory_space<vmem>>, vector<128x128xbf16>
    %cst_14 = arith.constant dense<0.000000e+00> : vector<8x128xf32>
    %19 = tpu.matmul %17, %18, %cst_14 {dimension_numbers = #tpu.dot_dimension_numbers<[1], [0], [0], [1], [0, 0, 1, 1], [], []>} : vector<8x128xbf16>, vector<128x128xbf16>, vector<8x128xf32> -> vector<8x128xf32>
    %c0_15 = arith.constant 0 : index
    %c0_16 = arith.constant 0 : index
    %20 = vector.load %arg7[%c0_15, %c0_16] : memref<1x128xf32, #tpu.memory_space<vmem>>, vector<1x128xf32>
    %21 = vector.broadcast %20 : vector<1x128xf32> to vector<8x128xf32>
    %22 = arith.addf %19, %21 : vector<8x128xf32>
    %cst_17 = arith.constant 0.000000e+00 : f32
    %23 = vector.broadcast %cst_17 : f32 to vector<8x128xf32>
    %24 = arith.maximumf %22, %23 : vector<8x128xf32>
    %25 = arith.truncf %24 : vector<8x128xf32> to vector<8x128xbf16>
    %c0_18 = arith.constant 0 : index
    %c0_19 = arith.constant 0 : index
    %26 = vector.load %arg8[%c0_18, %c0_19] : memref<128x128xbf16, #tpu.memory_space<vmem>>, vector<128x128xbf16>
    %cst_20 = arith.constant dense<0.000000e+00> : vector<8x128xf32>
    %27 = tpu.matmul %25, %26, %cst_20 {dimension_numbers = #tpu.dot_dimension_numbers<[1], [0], [0], [1], [0, 0, 1, 1], [], []>} : vector<8x128xbf16>, vector<128x128xbf16>, vector<8x128xf32> -> vector<8x128xf32>
    %c0_21 = arith.constant 0 : index
    %c0_22 = arith.constant 0 : index
    %28 = vector.load %arg9[%c0_21, %c0_22] : memref<1x128xf32, #tpu.memory_space<vmem>>, vector<1x128xf32>
    %29 = vector.broadcast %28 : vector<1x128xf32> to vector<8x128xf32>
    %30 = arith.addf %27, %29 : vector<8x128xf32>
    %c0_23 = arith.constant 0 : index
    %c0_24 = arith.constant 0 : index
    %31 = vector.load %arg10[%c0_23, %c0_24] : memref<8x128xf32, #tpu.memory_space<vmem>>, vector<8x128xf32>
    tpu.vector_store %arg10[%c0_23, %c0_24], %30 {strides = array<i32>} : memref<8x128xf32, #tpu.memory_space<vmem>>, vector<8x128xf32>,
    return
  }
  func.func @transform_0(%arg0: i32) -> (i32, i32) {
    %c0_i32 = arith.constant 0 : i32
    %c0_i32_0 = arith.constant 0 : i32
    return %arg0, %c0_i32 : i32, i32
  }
  func.func @transform_1(%arg0: i32) -> (i32, i32) {
    %c0_i32 = arith.constant 0 : i32
    %c0_i32_0 = arith.constant 0 : i32
    %c0_i32_1 = arith.constant 0 : i32
    return %c0_i32, %c0_i32_0 : i32, i32
  }
  func.func @transform_2(%arg0: i32) -> (i32, i32) {
    %c0_i32 = arith.constant 0 : i32
    %c0_i32_0 = arith.constant 0 : i32
    %c0_i32_1 = arith.constant 0 : i32
    return %c0_i32, %c0_i32_0 : i32, i32
  }
  func.func @transform_3(%arg0: i32) -> (i32, i32) {
    %c0_i32 = arith.constant 0 : i32
    %c0_i32_0 = arith.constant 0 : i32
    %c0_i32_1 = arith.constant 0 : i32
    return %c0_i32, %c0_i32_0 : i32, i32
  }
  func.func @transform_4(%arg0: i32) -> (i32, i32) {
    %c0_i32 = arith.constant 0 : i32
    %c0_i32_0 = arith.constant 0 : i32
    %c0_i32_1 = arith.constant 0 : i32
    return %c0_i32, %c0_i32_0 : i32, i32
  }
  func.func @transform_5(%arg0: i32) -> (i32, i32) {
    %c0_i32 = arith.constant 0 : i32
    %c0_i32_0 = arith.constant 0 : i32
    %c0_i32_1 = arith.constant 0 : i32
    return %c0_i32, %c0_i32_0 : i32, i32
  }
  func.func @transform_6(%arg0: i32) -> (i32, i32) {
    %c0_i32 = arith.constant 0 : i32
    %c0_i32_0 = arith.constant 0 : i32
    %c0_i32_1 = arith.constant 0 : i32
    return %c0_i32, %c0_i32_0 : i32, i32
  }
  func.func @transform_7(%arg0: i32) -> (i32, i32) {
    %c0_i32 = arith.constant 0 : i32
    %c0_i32_0 = arith.constant 0 : i32
    %c0_i32_1 = arith.constant 0 : i32
    return %c0_i32, %c0_i32_0 : i32, i32
  }
  func.func @transform_8(%arg0: i32) -> (i32, i32) {
    %c0_i32 = arith.constant 0 : i32
    %c0_i32_0 = arith.constant 0 : i32
    %c0_i32_1 = arith.constant 0 : i32
    return %c0_i32, %c0_i32_0 : i32, i32
  }
  func.func @transform_9(%arg0: i32) -> (i32, i32) {
    %c0_i32 = arith.constant 0 : i32
    %c0_i32_0 = arith.constant 0 : i32
    return %arg0, %c0_i32 : i32, i32
  }
}

</mosaic_0001>

<llo_original>
// kernel: cnn1d_frozen_conv_forward.1
$region0: #{cnn1d_frozen_conv_forward.1}
  #allocation0 [shape = 'u32[]', space=smem, size = 0x4, offset = 0x4, fixed_abs, tag = 'smem constant byte address 0x4 - core index']
  #allocation1 [shape = 'u32[144,128]{1,0:T(1,128)}', space=vmem, size = 0x12000, scoped, tag = 'internal scratch']
  %s0 = inlined_call_operand.vmem [shape: f32[8,16], index: 0, kind: input, shape index: {}]
  %s1 = inlined_call_operand.vmem [shape: bf16[16,128], index: 1, kind: input, shape index: {}]
  %s2 = inlined_call_operand.vmem [shape: f32[1,128], index: 2, kind: input, shape index: {}]
  %s3 = inlined_call_operand.hbm [shape: bf16[128,128], index: 3, kind: input, shape index: {}]
  %s4 = inlined_call_operand.vmem [shape: f32[1,128], index: 4, kind: input, shape index: {}]
  %s5 = inlined_call_operand.hbm [shape: bf16[128,128], index: 5, kind: input, shape index: {}]
  %s6 = inlined_call_operand.vmem [shape: f32[1,128], index: 6, kind: input, shape index: {}]
  %s7 = inlined_call_operand.hbm [shape: bf16[128,128], index: 7, kind: input, shape index: {}]
  %s8 = inlined_call_operand.vmem [shape: f32[1,128], index: 8, kind: input, shape index: {}]
  %s9 = inlined_call_operand.vmem [shape: f32[8,128], index: 9, kind: output, shape index: {}]
  %s10 = sld [smem:[#allocation0]]
  $region58: #{cnn1d_frozen_conv_forward.1} parent=0
    _
  %s12 = ssub.s32 1, %s10
  %s13 = scalar_select 0, %s12, %s10
  $region1: #{cnn1d_frozen_conv_forward.1} parent=0
    #allocation2 [shape = 'u8[32768]{0}', space=vmem, size = 0x8000, scoped, tag = 'input window, operand 3, single buffered']
    #allocation3 [shape = 's32[1]{0}', space=sflag, size = 0x4, scoped, tag = 'scoped memory for cnn1d_frozen_conv_forward.1']
    #allocation4 [shape = 'u8[32768]{0}', space=vmem, size = 0x8000, scoped, tag = 'input window, operand 5, single buffered']
    #allocation5 [shape = 's32[1]{0}', space=sflag, size = 0x4, scoped, tag = 'scoped memory for cnn1d_frozen_conv_forward.1']
    #allocation6 [shape = 'u8[32768]{0}', space=vmem, size = 0x8000, scoped, tag = 'input window, operand 7, single buffered']
    %14 = vsyncpa [#allocation3], 0
    %15 = vsyncpa [#allocation5], 0
    // Predicated region
    $region2: #{cnn1d_frozen_conv_forward.1} parent=1 // pred_check
      _
    $region3: #{cnn1d_frozen_conv_forward.1} parent=1 // pred_check_branch
      %17 = sbr.rel (0) target = $region5
    $region4: #{cnn1d_frozen_conv_forward.1} parent=1 // pred_region
      _
    $region5: #{cnn1d_frozen_conv_forward.1} parent=1 // pred_fallthru
      _
    // Predicated region
    $region6: #{cnn1d_frozen_conv_forward.1} parent=1 // pred_check
      _
    $region7: #{cnn1d_frozen_conv_forward.1} parent=1 // pred_check_branch
      %19 = sbr.rel (0) target = $region9
    $region8: #{cnn1d_frozen_conv_forward.1} parent=1 // pred_region
      _
    $region9: #{cnn1d_frozen_conv_forward.1} parent=1 // pred_fallthru
      _
    // Predicated region
    $region10: #{cnn1d_frozen_conv_forward.1} parent=1 // pred_check
      _
    $region11: #{cnn1d_frozen_conv_forward.1} parent=1 // pred_check_branch
      %21 = sbr.rel (0) target = $region13
    $region12: #{cnn1d_frozen_conv_forward.1} parent=1 // pred_region
      _
    $region13: #{cnn1d_frozen_conv_forward.1} parent=1 // pred_fallthru
      _
    // Predicated region
    $region14: #{cnn1d_frozen_conv_forward.1} parent=1 // pred_check
      _
    $region15: #{cnn1d_frozen_conv_forward.1} parent=1 // pred_check_branch
      %23 = sbr.rel (0) target = $region17
    $region16: #{cnn1d_frozen_conv_forward.1} parent=1 // pred_region
      %s25 = ssub.s32 1024, 1024
      %26 = vsyncadd [#allocation3], %s25
      %s27 = sshll.u32 [#allocation2], 4
      %s28 = int_to_ptr.vmem [resolvable:$true] %s27
      %33 = dma.hbm_to_vmem [thread:$0]  %s3, 1024, %s28, [#allocation3], 64, 64, 4
    $region17: #{cnn1d_frozen_conv_forward.1} parent=1 // pred_fallthru
      _
    // Predicated region
    $region18: #{cnn1d_frozen_conv_forward.1} parent=1 // pred_check
      _
    $region19: #{cnn1d_frozen_conv_forward.1} parent=1 // pred_check_branch
      %35 = sbr.rel (0) target = $region21
    $region20: #{cnn1d_frozen_conv_forward.1} parent=1 // pred_region
      _
    $region21: #{cnn1d_frozen_conv_forward.1} parent=1 // pred_fallthru
      _
    // Predicated region
    $region22: #{cnn1d_frozen_conv_forward.1} parent=1 // pred_check
      _
    $region23: #{cnn1d_frozen_conv_forward.1} parent=1 // pred_check_branch
      %37 = sbr.rel (0) target = $region25
    $region24: #{cnn1d_frozen_conv_forward.1} parent=1 // pred_region
      %s39 = ssub.s32 1024, 1024
      %40 = vsyncadd [#allocation5], %s39
      %s41 = sshll.u32 [#allocation4], 4
      %s42 = int_to_ptr.vmem [resolvable:$true] %s41
      %47 = dma.hbm_to_vmem [thread:$0]  %s5, 1024, %s42, [#allocation5], 64, 64, 4
    $region25: #{cnn1d_frozen_conv_forward.1} parent=1 // pred_fallthru
      _
    // Predicated region
    $region26: #{cnn1d_frozen_conv_forward.1} parent=1 // pred_check
      _
    $region27: #{cnn1d_frozen_conv_forward.1} parent=1 // pred_check_branch
      %49 = sbr.rel (0) target = $region29
    $region28: #{cnn1d_frozen_conv_forward.1} parent=1 // pred_region
      _
    $region29: #{cnn1d_frozen_conv_forward.1} parent=1 // pred_fallthru
      _
    // Predicated region
    $region30: #{cnn1d_frozen_conv_forward.1} parent=1 // pred_check
      _
    $region31: #{cnn1d_frozen_conv_forward.1} parent=1 // pred_check_branch
      %51 = sbr.rel (0) target = $region33
    $region32: #{cnn1d_frozen_conv_forward.1} parent=1 // pred_region
      %s53 = ssub.s32 1024, 1024
      %54 = vsyncadd [#allocation5], %s53
      %s55 = sshll.u32 [#allocation6], 4
      %s56 = int_to_ptr.vmem [resolvable:$true] %s55
      %61 = dma.hbm_to_vmem [thread:$0]  %s7, 1024, %s56, [#allocation5], 64, 64, 4
    $region33: #{cnn1d_frozen_conv_forward.1} parent=1 // pred_fallthru
      _
    // Predicated region
    $region34: #{cnn1d_frozen_conv_forward.1} parent=1 // pred_check
      _
    $region35: #{cnn1d_frozen_conv_forward.1} parent=1 // pred_check_branch
      %63 = sbr.rel (0) target = $region37
    $region36: #{cnn1d_frozen_conv_forward.1} parent=1 // pred_region
      _
    $region37: #{cnn1d_frozen_conv_forward.1} parent=1 // pred_fallthru
      _
    // Predicated region
    $region38: #{cnn1d_frozen_conv_forward.1} parent=1 // pred_check
      _
    $region39: #{cnn1d_frozen_conv_forward.1} parent=1 // pred_check_branch
      %65 = sbr.rel (0) target = $region41
    $region40: #{cnn1d_frozen_conv_forward.1} parent=1 // pred_region
      %66 = dma.done [#allocation3], 1024
    $region41: #{cnn1d_frozen_conv_forward.1} parent=1 // pred_fallthru
      _
    // Predicated region
    $region42: #{cnn1d_frozen_conv_forward.1} parent=1 // pred_check
      _
    $region43: #{cnn1d_frozen_conv_forward.1} parent=1 // pred_check_branch
      %68 = sbr.rel (0) target = $region45
    $region44: #{cnn1d_frozen_conv_forward.1} parent=1 // pred_region
      %69 = dma.done [#allocation5], 1024
    $region45: #{cnn1d_frozen_conv_forward.1} parent=1 // pred_fallthru
      _
    // Predicated region
    $region46: #{cnn1d_frozen_conv_forward.1} parent=1 // pred_check
      _
    $region47: #{cnn1d_frozen_conv_forward.1} parent=1 // pred_check_branch
      %71 = sbr.rel (0) target = $region49
    $region48: #{cnn1d_frozen_conv_forward.1} parent=1 // pred_region
      %72 = dma.done [#allocation5], 1024
    $region49: #{cnn1d_frozen_conv_forward.1} parent=1 // pred_fallthru
      _
    %v74 = vld [vmem:[%s0] sm:$0xff]
    %v75 = vpack.c.bf16 %v74, %v74
    %v76 = vld [vmem:[%s1] sm:$0xf]
    %v77 = vld [vmem:[%s1 + $0x4] sm:$0xf]
    %v78 = vld [vmem:[%s2] sm:$0x1]
    %v80 = vlaneseq
    %v81 = vshrl.u32 %v80, 7
    %v82 = vsub.s32 0, %v81
    %v83 = vrot.slane %v78, %v82
    %v87 = vunpack.c.l.b16 %v76
    %v88 = vunpack.c.l.b16 %v77
    %v89 = vpack.c.b16 %v88, %v87
    %vm91 = vcmask 130048
    %v93 = vsel %vm91, %v75, 0
    %95 = vmatprep.subr.bf16.mxu0 0
    %96 = vmatpush1.bf16.msra.mxu0 %v89
    %97 = vmatprep.subr.bf16.mxu0 0
    %98 = vmatpush1.bf16.msra.mxu0 0
    %99 = vmatprep.subr.bf16.mxu0 0
    %100 = vmatpush1.bf16.msra.mxu0 0
    %101 = vmatprep.subr.bf16.mxu0 0
    %102 = vmatpush1.bf16.msra.mxu0 0
    %103 = vmatprep.subr.bf16.mxu0 0
    %104 = vmatpush1.bf16.msra.mxu0 0
    %105 = vmatprep.subr.bf16.mxu0 0
    %106 = vmatpush1.bf16.msra.mxu0 0
    %107 = vmatprep.subr.bf16.mxu0 0
    %108 = vmatpush1.bf16.msra.mxu0 0
    %109 = vmatprep.subr.bf16.mxu0 0
    %110 = vmatpush1.bf16.msra.mxu0 0
    %111 = vmatprep.subr.bf16.mxu0 0
    %112 = vmatpush1.bf16.msra.mxu0 0
    %113 = vmatprep.subr.bf16.mxu0 0
    %114 = vmatpush1.bf16.msra.mxu0 0
    %115 = vmatprep.subr.bf16.mxu0 0
    %116 = vmatpush1.bf16.msra.mxu0 0
    %117 = vmatprep.subr.bf16.mxu0 0
    %118 = vmatpush1.bf16.msra.mxu0 0
    %119 = vmatprep.subr.bf16.mxu0 0
    %120 = vmatpush1.bf16.msra.mxu0 0
    %121 = vmatprep.subr.bf16.mxu0 0
    %122 = vmatpush1.bf16.msra.mxu0 0
    %123 = vmatprep.subr.bf16.mxu0 0
    %124 = vmatpush1.bf16.msra.mxu0 0
    %125 = vmatprep.subr.bf16.mxu0 0
    %126 = vmatpush1.bf16.msra.mxu0 0
    %127 = vmatprep.mubr.bf16.mxu0 0
    %128 = vmatmul.mubr.bf16.gmra.mrb[0].mxu0 %v93
    %v129 = vpop.f32.mrb[0].mxu0
    %v130 = vadd.f32 %v83, %v129
    %v131 = vpop.f32.mrb[0].mxu0
    %v132 = vpop.f32.mrb[0].mxu0
    %v133 = vpop.f32.mrb[0].mxu0
    %134 = vdwg.mxu0
    %v135 = vmax.f32 %v130, 0.0
    %v136 = vpack.c.bf16 %v135, %v135
    %v137 = vld [vmem:[#allocation2] sm:$0xf]
    %v138 = vld [vmem:[#allocation2 + $0x4] sm:$0xf]
    %v139 = vld [vmem:[#allocation2 + $0x8] sm:$0xf]
    %v140 = vld [vmem:[#allocation2 + $0xc] sm:$0xf]
    %v141 = vld [vmem:[#allocation2 + $0x10] sm:$0xf]
    %v142 = vld [vmem:[#allocation2 + $0x14] sm:$0xf]
    %v143 = vld [vmem:[#allocation2 + $0x18] sm:$0xf]
    %v144 = vld [vmem:[#allocation2 + $0x1c] sm:$0xf]
    %v145 = vld [vmem:[#allocation2 + $0x20] sm:$0xf]
    %v146 = vld [vmem:[#allocation2 + $0x24] sm:$0xf]
    %v147 = vld [vmem:[#allocation2 + $0x28] sm:$0xf]
    %v148 = vld [vmem:[#allocation2 + $0x2c] sm:$0xf]
    %v149 = vld [vmem:[#allocation2 + $0x30] sm:$0xf]
    %v150 = vld [vmem:[#allocation2 + $0x34] sm:$0xf]
    %v151 = vld [vmem:[#allocation2 + $0x38] sm:$0xf]
    %v152 = vld [vmem:[#allocation2 + $0x3c] sm:$0xf]
    %v153 = vld [vmem:[%s4] sm:$0x1]
    %v155 = vlaneseq
    %v156 = vshrl.u32 %v155, 7
    %v157 = vsub.s32 0, %v156
    %v158 = vrot.slane %v153, %v157
    %v176 = vunpack.c.l.b16 %v137
    %v177 = vunpack.c.l.b16 %v138
    %v178 = vunpack.c.l.b16 %v139
    %v179 = vunpack.c.l.b16 %v140
    %v180 = vunpack.c.l.b16 %v141
    %v181 = vunpack.c.l.b16 %v142
    %v182 = vunpack.c.l.b16 %v143
    %v183 = vunpack.c.l.b16 %v144
    %v184 = vunpack.c.l.b16 %v145
    %v185 = vunpack.c.l.b16 %v146
    %v186 = vunpack.c.l.b16 %v147
    %v187 = vunpack.c.l.b16 %v148
    %v188 = vunpack.c.l.b16 %v149
    %v189 = vunpack.c.l.b16 %v150
    %v190 = vunpack.c.l.b16 %v151
    %v191 = vunpack.c.l.b16 %v152
    %v192 = vpack.c.b16 %v177, %v176
    %v193 = vpack.c.b16 %v179, %v178
    %v194 = vpack.c.b16 %v181, %v180
    %v195 = vpack.c.b16 %v183, %v182
    %v196 = vpack.c.b16 %v185, %v184
    %v197 = vpack.c.b16 %v187, %v186
    %v198 = vpack.c.b16 %v189, %v188
    %v199 = vpack.c.b16 %v191, %v190
    %208 = vmatprep.subr.bf16.mxu0 0
    %209 = vmatpush1.bf16.msra.mxu0 %v192
    %210 = vmatprep.subr.bf16.mxu0 0
    %211 = vmatpush1.bf16.msra.mxu0 %v193
    %212 = vmatprep.subr.bf16.mxu0 0
    %213 = vmatpush1.bf16.msra.mxu0 %v194
    %214 = vmatprep.subr.bf16.mxu0 0
    %215 = vmatpush1.bf16.msra.mxu0 %v195
    %216 = vmatprep.subr.bf16.mxu0 0
    %217 = vmatpush1.bf16.msra.mxu0 %v196
    %218 = vmatprep.subr.bf16.mxu0 0
    %219 = vmatpush1.bf16.msra.mxu0 %v197
    %220 = vmatprep.subr.bf16.mxu0 0
    %221 = vmatpush1.bf16.msra.mxu0 %v198
    %222 = vmatprep.subr.bf16.mxu0 0
    %223 = vmatpush1.bf16.msra.mxu0 %v199
    %224 = vmatprep.subr.bf16.mxu0 0
    %225 = vmatpush1.bf16.msra.mxu0 0
    %226 = vmatprep.subr.bf16.mxu0 0
    %227 = vmatpush1.bf16.msra.mxu0 0
    %228 = vmatprep.subr.bf16.mxu0 0
    %229 = vmatpush1.bf16.msra.mxu0 0
    %230 = vmatprep.subr.bf16.mxu0 0
    %231 = vmatpush1.bf16.msra.mxu0 0
    %232 = vmatprep.subr.bf16.mxu0 0
    %233 = vmatpush1.bf16.msra.mxu0 0
    %234 = vmatprep.subr.bf16.mxu0 0
    %235 = vmatpush1.bf16.msra.mxu0 0
    %236 = vmatprep.subr.bf16.mxu0 0
    %237 = vmatpush1.bf16.msra.mxu0 0
    %238 = vmatprep.subr.bf16.mxu0 0
    %239 = vmatpush1.bf16.msra.mxu0 0
    %240 = vmatprep.mubr.bf16.mxu0 0
    %241 = vmatmul.mubr.bf16.gmra.mrb[0].mxu0 %v136
    %v242 = vpop.f32.mrb[0].mxu0
    %v243 = vadd.f32 %v158, %v242
    %v244 = vpop.f32.mrb[0].mxu0
    %v245 = vpop.f32.mrb[0].mxu0
    %v246 = vpop.f32.mrb[0].mxu0
    %247 = vdwg.mxu0
    %v248 = vmax.f32 %v243, 0.0
    %v249 = vpack.c.bf16 %v248, %v248
    %v250 = vld [vmem:[#allocation4] sm:$0xf]
    %v251 = vld [vmem:[#allocation4 + $0x4] sm:$0xf]
    %v252 = vld [vmem:[#allocation4 + $0x8] sm:$0xf]
    %v253 = vld [vmem:[#allocation4 + $0xc] sm:$0xf]
    %v254 = vld [vmem:[#allocation4 + $0x10] sm:$0xf]
    %v255 = vld [vmem:[#allocation4 + $0x14] sm:$0xf]
    %v256 = vld [vmem:[#allocation4 + $0x18] sm:$0xf]
    %v257 = vld [vmem:[#allocation4 + $0x1c] sm:$0xf]
    %v258 = vld [vmem:[#allocation4 + $0x20] sm:$0xf]
    %v259 = vld [vmem:[#allocation4 + $0x24] sm:$0xf]
    %v260 = vld [vmem:[#allocation4 + $0x28] sm:$0xf]
    %v261 = vld [vmem:[#allocation4 + $0x2c] sm:$0xf]
    %v262 = vld [vmem:[#allocation4 + $0x30] sm:$0xf]
    %v263 = vld [vmem:[#allocation4 + $0x34] sm:$0xf]
    %v264 = vld [vmem:[#allocation4 + $0x38] sm:$0xf]
    %v265 = vld [vmem:[#allocation4 + $0x3c] sm:$0xf]
    %v266 = vld [vmem:[%s6] sm:$0x1]
    %v268 = vlaneseq
    %v269 = vshrl.u32 %v268, 7
    %v270 = vsub.s32 0, %v269
    %v271 = vrot.slane %v266, %v270
    %v289 = vunpack.c.l.b16 %v250
    %v290 = vunpack.c.l.b16 %v251
    %v291 = vunpack.c.l.b16 %v252
    %v292 = vunpack.c.l.b16 %v253
    %v293 = vunpack.c.l.b16 %v254
    %v294 = vunpack.c.l.b16 %v255
    %v295 = vunpack.c.l.b16 %v256
    %v296 = vunpack.c.l.b16 %v257
    %v297 = vunpack.c.l.b16 %v258
    %v298 = vunpack.c.l.b16 %v259
    %v299 = vunpack.c.l.b16 %v260
    %v300 = vunpack.c.l.b16 %v261
    %v301 = vunpack.c.l.b16 %v262
    %v302 = vunpack.c.l.b16 %v263
    %v303 = vunpack.c.l.b16 %v264
    %v304 = vunpack.c.l.b16 %v265
    %v305 = vpack.c.b16 %v290, %v289
    %v306 = vpack.c.b16 %v292, %v291
    %v307 = vpack.c.b16 %v294, %v293
    %v308 = vpack.c.b16 %v296, %v295
    %v309 = vpack.c.b16 %v298, %v297
    %v310 = vpack.c.b16 %v300, %v299
    %v311 = vpack.c.b16 %v302, %v301
    %v312 = vpack.c.b16 %v304, %v303
    %321 = vmatprep.subr.bf16.mxu0 0
    %322 = vmatpush1.bf16.msra.mxu0 %v305
    %323 = vmatprep.subr.bf16.mxu0 0
    %324 = vmatpush1.bf16.msra.mxu0 %v306
    %325 = vmatprep.subr.bf16.mxu0 0
    %326 = vmatpush1.bf16.msra.mxu0 %v307
    %327 = vmatprep.subr.bf16.mxu0 0
    %328 = vmatpush1.bf16.msra.mxu0 %v308
    %329 = vmatprep.subr.bf16.mxu0 0
    %330 = vmatpush1.bf16.msra.mxu0 %v309
    %331 = vmatprep.subr.bf16.mxu0 0
    %332 = vmatpush1.bf16.msra.mxu0 %v310
    %333 = vmatprep.subr.bf16.mxu0 0
    %334 = vmatpush1.bf16.msra.mxu0 %v311
    %335 = vmatprep.subr.bf16.mxu0 0
    %336 = vmatpush1.bf16.msra.mxu0 %v312
    %337 = vmatprep.subr.bf16.mxu0 0
    %338 = vmatpush1.bf16.msra.mxu0 0
    %339 = vmatprep.subr.bf16.mxu0 0
    %340 = vmatpush1.bf16.msra.mxu0 0
    %341 = vmatprep.subr.bf16.mxu0 0
    %342 = vmatpush1.bf16.msra.mxu0 0
    %343 = vmatprep.subr.bf16.mxu0 0
    %344 = vmatpush1.bf16.msra.mxu0 0
    %345 = vmatprep.subr.bf16.mxu0 0
    %346 = vmatpush1.bf16.msra.mxu0 0
    %347 = vmatprep.subr.bf16.mxu0 0
    %348 = vmatpush1.bf16.msra.mxu0 0
    %349 = vmatprep.subr.bf16.mxu0 0
    %350 = vmatpush1.bf16.msra.mxu0 0
    %351 = vmatprep.subr.bf16.mxu0 0
    %352 = vmatpush1.bf16.msra.mxu0 0
    %353 = vmatprep.mubr.bf16.mxu0 0
    %354 = vmatmul.mubr.bf16.gmra.mrb[0].mxu0 %v249
    %v355 = vpop.f32.mrb[0].mxu0
    %v356 = vadd.f32 %v271, %v355
    %v357 = vpop.f32.mrb[0].mxu0
    %v358 = vpop.f32.mrb[0].mxu0
    %v359 = vpop.f32.mrb[0].mxu0
    %360 = vdwg.mxu0
    %v361 = vmax.f32 %v356, 0.0
    %v362 = vpack.c.bf16 %v361, %v361
    %v363 = vld [vmem:[#allocation6] sm:$0xf]
    %v364 = vld [vmem:[#allocation6 + $0x4] sm:$0xf]
    %v365 = vld [vmem:[#allocation6 + $0x8] sm:$0xf]
    %v366 = vld [vmem:[#allocation6 + $0xc] sm:$0xf]
    %v367 = vld [vmem:[#allocation6 + $0x10] sm:$0xf]
    %v368 = vld [vmem:[#allocation6 + $0x14] sm:$0xf]
    %v369 = vld [vmem:[#allocation6 + $0x18] sm:$0xf]
    %v370 = vld [vmem:[#allocation6 + $0x1c] sm:$0xf]
    %v371 = vld [vmem:[#allocation6 + $0x20] sm:$0xf]
    %v372 = vld [vmem:[#allocation6 + $0x24] sm:$0xf]
    %v373 = vld [vmem:[#allocation6 + $0x28] sm:$0xf]
    %v374 = vld [vmem:[#allocation6 + $0x2c] sm:$0xf]
    %v375 = vld [vmem:[#allocation6 + $0x30] sm:$0xf]
    %v376 = vld [vmem:[#allocation6 + $0x34] sm:$0xf]
    %v377 = vld [vmem:[#allocation6 + $0x38] sm:$0xf]
    %v378 = vld [vmem:[#allocation6 + $0x3c] sm:$0xf]
    %v379 = vld [vmem:[%s8] sm:$0x1]
    %v381 = vlaneseq
    %v382 = vshrl.u32 %v381, 7
    %v383 = vsub.s32 0, %v382
    %v384 = vrot.slane %v379, %v383
    %v402 = vunpack.c.l.b16 %v363
    %v403 = vunpack.c.l.b16 %v364
    %v404 = vunpack.c.l.b16 %v365
    %v405 = vunpack.c.l.b16 %v366
    %v406 = vunpack.c.l.b16 %v367
    %v407 = vunpack.c.l.b16 %v368
    %v408 = vunpack.c.l.b16 %v369
    %v409 = vunpack.c.l.b16 %v370
    %v410 = vunpack.c.l.b16 %v371
    %v411 = vunpack.c.l.b16 %v372
    %v412 = vunpack.c.l.b16 %v373
    %v413 = vunpack.c.l.b16 %v374
    %v414 = vunpack.c.l.b16 %v375
    %v415 = vunpack.c.l.b16 %v376
    %v416 = vunpack.c.l.b16 %v377
    %v417 = vunpack.c.l.b16 %v378
    %v418 = vpack.c.b16 %v403, %v402
    %v419 = vpack.c.b16 %v405, %v404
    %v420 = vpack.c.b16 %v407, %v406
    %v421 = vpack.c.b16 %v409, %v408
    %v422 = vpack.c.b16 %v411, %v410
    %v423 = vpack.c.b16 %v413, %v412
    %v424 = vpack.c.b16 %v415, %v414
    %v425 = vpack.c.b16 %v417, %v416
    %434 = vmatprep.subr.bf16.mxu0 0
    %435 = vmatpush1.bf16.msra.mxu0 %v418
    %436 = vmatprep.subr.bf16.mxu0 0
    %437 = vmatpush1.bf16.msra.mxu0 %v419
    %438 = vmatprep.subr.bf16.mxu0 0
    %439 = vmatpush1.bf16.msra.mxu0 %v420
    %440 = vmatprep.subr.bf16.mxu0 0
    %441 = vmatpush1.bf16.msra.mxu0 %v421
    %442 = vmatprep.subr.bf16.mxu0 0
    %443 = vmatpush1.bf16.msra.mxu0 %v422
    %444 = vmatprep.subr.bf16.mxu0 0
    %445 = vmatpush1.bf16.msra.mxu0 %v423
    %446 = vmatprep.subr.bf16.mxu0 0
    %447 = vmatpush1.bf16.msra.mxu0 %v424
    %448 = vmatprep.subr.bf16.mxu0 0
    %449 = vmatpush1.bf16.msra.mxu0 %v425
    %450 = vmatprep.subr.bf16.mxu0 0
    %451 = vmatpush1.bf16.msra.mxu0 0
    %452 = vmatprep.subr.bf16.mxu0 0
    %453 = vmatpush1.bf16.msra.mxu0 0
    %454 = vmatprep.subr.bf16.mxu0 0
    %455 = vmatpush1.bf16.msra.mxu0 0
    %456 = vmatprep.subr.bf16.mxu0 0
    %457 = vmatpush1.bf16.msra.mxu0 0
    %458 = vmatprep.subr.bf16.mxu0 0
    %459 = vmatpush1.bf16.msra.mxu0 0
    %460 = vmatprep.subr.bf16.mxu0 0
    %461 = vmatpush1.bf16.msra.mxu0 0
    %462 = vmatprep.subr.bf16.mxu0 0
    %463 = vmatpush1.bf16.msra.mxu0 0
    %464 = vmatprep.subr.bf16.mxu0 0
    %465 = vmatpush1.bf16.msra.mxu0 0
    %466 = vmatprep.mubr.bf16.mxu0 0
    %467 = vmatmul.mubr.bf16.gmra.mrb[0].mxu0 %v362
    %v468 = vpop.f32.mrb[0].mxu0
    %v469 = vadd.f32 %v384, %v468
    %v470 = vpop.f32.mrb[0].mxu0
    %v471 = vpop.f32.mrb[0].mxu0
    %v472 = vpop.f32.mrb[0].mxu0
    %473 = vdwg.mxu0
    %474 = vst [vmem:[%s9] sm:$0xff] %v469
    // Predicated region
    $region50: #{cnn1d_frozen_conv_forward.1} parent=1 // pred_check
      _
    $region51: #{cnn1d_frozen_conv_forward.1} parent=1 // pred_check_branch
      %476 = sbr.rel (0) target = $region53
    $region52: #{cnn1d_frozen_conv_forward.1} parent=1 // pred_region
      _
    $region53: #{cnn1d_frozen_conv_forward.1} parent=1 // pred_fallthru
      _
    // Predicated region
    $region54: #{cnn1d_frozen_conv_forward.1} parent=1 // pred_check
      _
    $region55: #{cnn1d_frozen_conv_forward.1} parent=1 // pred_check_branch
      %478 = sbr.rel (0) target = $region57
    $region56: #{cnn1d_frozen_conv_forward.1} parent=1 // pred_region
      _
    $region57: #{cnn1d_frozen_conv_forward.1} parent=1 // pred_fallthru
      _
    %479 = vsyncpa [#allocation3], 1
    %480 = vsyncpa [#allocation5], 1

</llo_original>
